<compile_context>
chip_gen: v7x
topology: tpu7x:2x2x1
jax: 0.10.0
libtpu: 0.0.40
codegen_flags: <defaults>
</compile_context>

<pallas_src>
import functools

import jax
import jax.numpy as jnp
from jax.experimental import pallas as pl
from jax.experimental.pallas import tpu as pltpu

HIDDEN = 32
NGATES = 4                      # i, f, c, o
GATES = NGATES * HIDDEN         # 128 -> exactly one lane group
HEAD = 2 * HIDDEN               # 64 lanes reserved for the linear head (col 0 real)
PACK = 2 * HIDDEN + HEAD        # 128-lane packed output: [H' | C' | y ...]


def _round_up(n, m):
    return ((n + m - 1) // m) * m


def _lrgcn_kernel(a_ref, xh_ref, c_ref, wagg_ref, wroot_ref, wlin_ref, blin_ref,
                  out_ref, *, tm):
    i = pl.program_id(0)
    row0 = pl.multiple_of(i * tm, 8)

    A = a_ref[...]                       # (tm, Np)   row tile of normalized adjacency
    XH_all = xh_ref[...]                 # (Np, F+33) full [X | H | 1], grid-resident
    XH = xh_ref[pl.ds(row0, tm), :]      # (tm, F+33) row tile sliced from resident buf
    C = c_ref[...]                       # (tm, 32)

    # Single fused aggregation matmul (covers A@X and A@H in one K=N MXU pass).
    AXH = jnp.dot(A, XH_all, preferred_element_type=jnp.float32)        # (tm, F+33)

    # All 8 RGCNConv weight applications in two 128-lane matmuls; biases folded in.
    g = (jnp.dot(AXH, wagg_ref[...], preferred_element_type=jnp.float32)
         + jnp.dot(XH, wroot_ref[...], preferred_element_type=jnp.float32))  # (tm,128)

    i_gate = jax.nn.sigmoid(g[:, 0 * HIDDEN:1 * HIDDEN])
    f_gate = jax.nn.sigmoid(g[:, 1 * HIDDEN:2 * HIDDEN])
    t_cell = jnp.tanh(g[:, 2 * HIDDEN:3 * HIDDEN])
    o_gate = jax.nn.sigmoid(g[:, 3 * HIDDEN:4 * HIDDEN])

    c_new = f_gate * C + i_gate * t_cell
    h_new = o_gate * jnp.tanh(c_new)
    h_relu = jnp.maximum(h_new, 0.0)

    # Linear head on 64 padded lanes; only column 0 is meaningful.
    y = (jnp.dot(h_relu, wlin_ref[...], preferred_element_type=jnp.float32)
         + blin_ref[...])                                               # (tm, 64)

    # Pack everything into one lane-dense 128-wide block -> single unmasked writeback.
    out_ref[:, 0:HIDDEN] = h_new
    out_ref[:, HIDDEN:2 * HIDDEN] = c_new
    out_ref[:, 2 * HIDDEN:] = y


@jax.jit
def recurrent_gcn_lrgcn_forward(x, edge_index, edge_weight, h0, c0, params):
    """Forward pass of RecurrentGCN_LRGCN. Returns (y, h_new, c_new)."""
    del edge_weight  # LRGCN treats this arg as edge_type; num_relations == 1.
    N, F = x.shape
    wagg, wroot, wlin_pad, blin_pad = params
    Faug = F + HIDDEN + 1

    # Dense mean-normalized adjacency, A[dst, src] = 1/in_deg(dst) (PyG aggr='mean').
    # TODO(synk): for large sparse graphs keep CSR (offsets / cols / 1/deg) in SMEM via
    # pltpu.PrefetchScalarGridSpec and gather per row tile instead of the dense O(N^2) A.
    src = edge_index[0]
    dst = edge_index[1]
    A = jnp.zeros((N, N), jnp.float32).at[dst, src].add(1.0)
    deg = jnp.sum(A, axis=1, keepdims=True)
    A = A * jnp.where(deg > 0, 1.0 / jnp.maximum(deg, 1.0), 0.0)

    # Augmented node features [X | H | 1]: one fused aggregation + bias folding.
    xh = jnp.concatenate([x, h0, jnp.ones((N, 1), jnp.float32)], axis=1)   # (N, F+33)

    # Row tiling: tm multiple of 8 (sublane), capped at 256; pad rows to a whole grid.
    tm = min(256, _round_up(N, 8))
    Np = _round_up(N, tm)
    pad = Np - N
    if pad:
        A = jnp.pad(A, ((0, pad), (0, pad)))
        xh = jnp.pad(xh, ((0, pad), (0, 0)))
        c0 = jnp.pad(c0, ((0, pad), (0, 0)))

    grid = (Np // tm,)

    in_specs = [
        pl.BlockSpec((tm, Np), lambda i: (i, 0)),          # A row tile
        pl.BlockSpec((Np, Faug), lambda i: (0, 0)),        # XH full (resident)
        pl.BlockSpec((tm, HIDDEN), lambda i: (i, 0)),      # C row tile
        pl.BlockSpec((Faug, GATES), lambda i: (0, 0)),     # Wagg (resident)
        pl.BlockSpec((Faug, GATES), lambda i: (0, 0)),     # Wroot + folded bias
        pl.BlockSpec((HIDDEN, HEAD), lambda i: (0, 0)),    # wlin padded to 64 lanes
        pl.BlockSpec((1, HEAD), lambda i: (0, 0)),         # blin padded to 64 lanes
    ]
    out_spec = pl.BlockSpec((tm, PACK), lambda i: (i, 0))  # packed [H' | C' | y pad]

    packed = pl.pallas_call(
        functools.partial(_lrgcn_kernel, tm=tm),
        out_shape=jax.ShapeDtypeStruct((Np, PACK), jnp.float32),
        grid=grid,
        in_specs=in_specs,
        out_specs=out_spec,
        compiler_params=pltpu.CompilerParams(
            dimension_semantics=("parallel",)),            # 2 TCs on v7x; no-op elsewhere
    )(A, xh, c0, wagg, wroot, wlin_pad, blin_pad)

    h_new = packed[:N, 0:HIDDEN]
    c_new = packed[:N, HIDDEN:2 * HIDDEN]
    y = packed[:N, 2 * HIDDEN:2 * HIDDEN + 1]
    return y, h_new, c_new


def init_params(key, node_features):
    """LRGCN(node_features, 32, 1, 1) + Linear(32, 1) parameters, pre-packed for the MXU.

    Gate order along the 128-wide output axis: [i, f, c, o].
      Wagg  = [wx; wh; 0]       -> multiplies A @ [X | H | 1]
      Wroot = [rx; rh; bx + bh] -> multiplies      [X | H | 1]  (bias folded via ones col)
      wlin/blin zero-padded to 64 output lanes (only column 0 is real).
    """
    keys = jax.random.split(key, 8)

    def glorot(k, shape):
        limit = jnp.sqrt(6.0 / (shape[0] + shape[1]))
        return jax.random.uniform(k, shape, jnp.float32, -limit, limit)

    F = node_features
    wx = glorot(keys[0], (F, GATES))          # relation weights, X-convs
    rx = glorot(keys[1], (F, GATES))          # root weights, X-convs
    bx = 0.01 * jax.random.normal(keys[2], (1, GATES), jnp.float32)
    wh = glorot(keys[3], (HIDDEN, GATES))     # relation weights, H-convs
    rh = glorot(keys[4], (HIDDEN, GATES))     # root weights, H-convs
    bh = 0.01 * jax.random.normal(keys[5], (1, GATES), jnp.float32)
    wlin = glorot(keys[6], (HIDDEN, 1))       # torch Linear weight (transposed)
    blin = 0.01 * jax.random.normal(keys[7], (1, 1), jnp.float32)

    wagg = jnp.concatenate([wx, wh, jnp.zeros((1, GATES), jnp.float32)], axis=0)
    wroot = jnp.concatenate([rx, rh, bx + bh], axis=0)
    wlin_pad = jnp.concatenate([wlin, jnp.zeros((HIDDEN, HEAD - 1), jnp.float32)], axis=1)
    blin_pad = jnp.concatenate([blin, jnp.zeros((1, HEAD - 1), jnp.float32)], axis=1)
    return (wagg, wroot, wlin_pad, blin_pad)


def _reference(x, edge_index, h0, c0, params):
    """Plain-JAX reference with the same packed parameters (sanity check only)."""
    wagg, wroot, wlin_pad, blin_pad = params
    N = x.shape[0]
    src, dst = edge_index[0], edge_index[1]
    A = jnp.zeros((N, N), jnp.float32).at[dst, src].add(1.0)
    deg = jnp.sum(A, axis=1, keepdims=True)
    A = A * jnp.where(deg > 0, 1.0 / jnp.maximum(deg, 1.0), 0.0)
    xh = jnp.concatenate([x, h0, jnp.ones((N, 1), jnp.float32)], axis=1)
    dot = functools.partial(jnp.dot, precision=jax.lax.Precision.HIGHEST)
    g = dot(dot(A, xh), wagg) + dot(xh, wroot)
    i = jax.nn.sigmoid(g[:, 0:32])
    f = jax.nn.sigmoid(g[:, 32:64])
    t = jnp.tanh(g[:, 64:96])
    o = jax.nn.sigmoid(g[:, 96:128])
    c_new = f * c0 + i * t
    h_new = o * jnp.tanh(c_new)
    y = dot(jnp.maximum(h_new, 0.0), wlin_pad[:, :1]) + blin_pad[:, :1]
    return y, h_new, c_new


if __name__ == "__main__":
    key = jax.random.PRNGKey(0)
    k_x, k_ei, k_ew, k_h, k_c, k_p = jax.random.split(key, 6)

    num_nodes = 16
    node_features = 4
    num_edges = 40

    x = jax.random.normal(k_x, (num_nodes, node_features), jnp.float32)
    edge_index = jax.random.randint(k_ei, (2, num_edges), 0, num_nodes, jnp.int32)
    edge_weight = jax.random.uniform(k_ew, (num_edges,), jnp.float32)
    h_0 = jax.random.normal(k_h, (num_nodes, HIDDEN), jnp.float32)
    c_0 = jax.random.normal(k_c, (num_nodes, HIDDEN), jnp.float32)

    params = init_params(k_p, node_features)

    y, h_new, c_new = recurrent_gcn_lrgcn_forward(
        x, edge_index, edge_weight, h_0, c_0, params)
    jax.block_until_ready((y, h_new, c_new))

    assert y.shape == (num_nodes, 1)
    assert h_new.shape == (num_nodes, HIDDEN)
    assert c_new.shape == (num_nodes, HIDDEN)

    # Loose sanity check against a pure-JAX reference (guards semantics, not numerics).
    y_r, h_r, c_r = _reference(x, edge_index, h_0, c_0, params)
    assert jnp.max(jnp.abs(y - y_r)) < 1e-2
    assert jnp.max(jnp.abs(h_new - h_r)) < 1e-2
    assert jnp.max(jnp.abs(c_new - c_r)) < 1e-2

    print("KERNEL_OK")
</pallas_src>

<mosaic_0001>
module attributes {stable_mosaic.version = 11 : i64} {
  func.func @_lrgcn_kernel(%arg0: i32, %arg1: memref<16x16xf32, #tpu.memory_space<vmem>>, %arg2: memref<16x37xf32, #tpu.memory_space<vmem>>, %arg3: memref<16x32xf32, #tpu.memory_space<vmem>>, %arg4: memref<37x128xf32, #tpu.memory_space<vmem>>, %arg5: memref<37x128xf32, #tpu.memory_space<vmem>>, %arg6: memref<32x64xf32, #tpu.memory_space<vmem>>, %arg7: memref<1x64xf32, #tpu.memory_space<vmem>>, %arg8: memref<16x128xf32, #tpu.memory_space<vmem>>) attributes {dimension_semantics = [#tpu.dimension_semantics<parallel>], iteration_bounds = array<i64: 1>, scalar_prefetch = 0 : i64, scratch_operands = 0 : i64, tpu.core_type = #tpu.core_type<tc>, window_params = [{transform_indices = @transform_0, window_bounds = array<i64: 16, 16>}, {pipeline_mode = #tpu.pipeline_mode<synchronous>, transform_indices = @transform_1, window_bounds = array<i64: 16, 37>}, {transform_indices = @transform_2, window_bounds = array<i64: 16, 32>}, {pipeline_mode = #tpu.pipeline_mode<synchronous>, transform_indices = @transform_3, window_bounds = array<i64: 37, 128>}, {pipeline_mode = #tpu.pipeline_mode<synchronous>, transform_indices = @transform_4, window_bounds = array<i64: 37, 128>}, {pipeline_mode = #tpu.pipeline_mode<synchronous>, transform_indices = @transform_5, window_bounds = array<i64: 32, 64>}, {pipeline_mode = #tpu.pipeline_mode<synchronous>, transform_indices = @transform_6, window_bounds = array<i64: 1, 64>}, {transform_indices = @transform_7, window_bounds = array<i64: 16, 128>}]} {
    %c16_i32 = arith.constant 16 : i32
    %0 = arith.muli %arg0, %c16_i32 : i32
    %1 = tpu.assume_multiple %0, 8 : i32
    %c0 = arith.constant 0 : index
    %c0_0 = arith.constant 0 : index
    %2 = vector.load %arg1[%c0, %c0_0] : memref<16x16xf32, #tpu.memory_space<vmem>>, vector<16x16xf32>
    %c0_1 = arith.constant 0 : index
    %c0_2 = arith.constant 0 : index
    %3 = vector.load %arg2[%c0_1, %c0_2] : memref<16x37xf32, #tpu.memory_space<vmem>>, vector<16x37xf32>
    %4 = arith.index_cast %1 : i32 to index
    %c0_3 = arith.constant 0 : index
    %5 = vector.load %arg2[%4, %c0_3] : memref<16x37xf32, #tpu.memory_space<vmem>>, vector<16x37xf32>
    %c0_4 = arith.constant 0 : index
    %c0_5 = arith.constant 0 : index
    %6 = vector.load %arg3[%c0_4, %c0_5] : memref<16x32xf32, #tpu.memory_space<vmem>>, vector<16x32xf32>
    %cst = arith.constant dense<0.000000e+00> : vector<16x37xf32>
    %7 = tpu.matmul %2, %3, %cst {dimension_numbers = #tpu.dot_dimension_numbers<[1], [0], [0], [1], [0, 0, 1, 1], [], []>} : vector<16x16xf32>, vector<16x37xf32>, vector<16x37xf32> -> vector<16x37xf32>
    %c0_6 = arith.constant 0 : index
    %c0_7 = arith.constant 0 : index
    %8 = vector.load %arg4[%c0_6, %c0_7] : memref<37x128xf32, #tpu.memory_space<vmem>>, vector<37x128xf32>
    %cst_8 = arith.constant dense<0.000000e+00> : vector<16x128xf32>
    %9 = tpu.matmul %7, %8, %cst_8 {dimension_numbers = #tpu.dot_dimension_numbers<[1], [0], [0], [1], [0, 0, 1, 1], [], []>} : vector<16x37xf32>, vector<37x128xf32>, vector<16x128xf32> -> vector<16x128xf32>
    %c0_9 = arith.constant 0 : index
    %c0_10 = arith.constant 0 : index
    %10 = vector.load %arg5[%c0_9, %c0_10] : memref<37x128xf32, #tpu.memory_space<vmem>>, vector<37x128xf32>
    %cst_11 = arith.constant dense<0.000000e+00> : vector<16x128xf32>
    %11 = tpu.matmul %5, %10, %cst_11 {dimension_numbers = #tpu.dot_dimension_numbers<[1], [0], [0], [1], [0, 0, 1, 1], [], []>} : vector<16x37xf32>, vector<37x128xf32>, vector<16x128xf32> -> vector<16x128xf32>
    %12 = arith.addf %9, %11 : vector<16x128xf32>
    %13 = vector.extract_strided_slice %12 {offsets = [0, 0], sizes = [16, 32], strides = [1, 1]} : vector<16x128xf32> to vector<16x32xf32>
    %14 = arith.negf %13 : vector<16x32xf32>
    %15 = math.exp %14 : vector<16x32xf32>
    %cst_12 = arith.constant 1.000000e+00 : f32
    %16 = vector.broadcast %cst_12 : f32 to vector<16x32xf32>
    %17 = arith.addf %16, %15 : vector<16x32xf32>
    %18 = arith.divf %16, %17 : vector<16x32xf32>
    %19 = vector.extract_strided_slice %12 {offsets = [0, 32], sizes = [16, 32], strides = [1, 1]} : vector<16x128xf32> to vector<16x32xf32>
    %20 = arith.negf %19 : vector<16x32xf32>
    %21 = math.exp %20 : vector<16x32xf32>
    %cst_13 = arith.constant 1.000000e+00 : f32
    %22 = vector.broadcast %cst_13 : f32 to vector<16x32xf32>
    %23 = arith.addf %22, %21 : vector<16x32xf32>
    %24 = arith.divf %22, %23 : vector<16x32xf32>
    %25 = vector.extract_strided_slice %12 {offsets = [0, 64], sizes = [16, 32], strides = [1, 1]} : vector<16x128xf32> to vector<16x32xf32>
    %26 = math.tanh %25 : vector<16x32xf32>
    %27 = vector.extract_strided_slice %12 {offsets = [0, 96], sizes = [16, 32], strides = [1, 1]} : vector<16x128xf32> to vector<16x32xf32>
    %28 = arith.negf %27 : vector<16x32xf32>
    %29 = math.exp %28 : vector<16x32xf32>
    %cst_14 = arith.constant 1.000000e+00 : f32
    %30 = vector.broadcast %cst_14 : f32 to vector<16x32xf32>
    %31 = arith.addf %30, %29 : vector<16x32xf32>
    %32 = arith.divf %30, %31 : vector<16x32xf32>
    %33 = arith.mulf %24, %6 : vector<16x32xf32>
    %34 = arith.mulf %18, %26 : vector<16x32xf32>
    %35 = arith.addf %33, %34 : vector<16x32xf32>
    %36 = math.tanh %35 : vector<16x32xf32>
    %37 = arith.mulf %32, %36 : vector<16x32xf32>
    %cst_15 = arith.constant 0.000000e+00 : f32
    %38 = vector.broadcast %cst_15 : f32 to vector<16x32xf32>
    %39 = arith.maximumf %37, %38 : vector<16x32xf32>
    %c0_16 = arith.constant 0 : index
    %c0_17 = arith.constant 0 : index
    %40 = vector.load %arg6[%c0_16, %c0_17] : memref<32x64xf32, #tpu.memory_space<vmem>>, vector<32x64xf32>
    %cst_18 = arith.constant dense<0.000000e+00> : vector<16x64xf32>
    %41 = tpu.matmul %39, %40, %cst_18 {dimension_numbers = #tpu.dot_dimension_numbers<[1], [0], [0], [1], [0, 0, 1, 1], [], []>} : vector<16x32xf32>, vector<32x64xf32>, vector<16x64xf32> -> vector<16x64xf32>
    %c0_19 = arith.constant 0 : index
    %c0_20 = arith.constant 0 : index
    %42 = vector.load %arg7[%c0_19, %c0_20] : memref<1x64xf32, #tpu.memory_space<vmem>>, vector<1x64xf32>
    %43 = vector.broadcast %42 : vector<1x64xf32> to vector<16x64xf32>
    %44 = arith.addf %41, %43 : vector<16x64xf32>
    %c0_21 = arith.constant 0 : index
    %c0_22 = arith.constant 0 : index
    %45 = vector.load %arg8[%c0_21, %c0_22] : memref<16x128xf32, #tpu.memory_space<vmem>>, vector<16x32xf32>
    tpu.vector_store %arg8[%c0_21, %c0_22], %37 {strides = array<i32>} : memref<16x128xf32, #tpu.memory_space<vmem>>, vector<16x32xf32>,
    %c0_23 = arith.constant 0 : index
    %c32 = arith.constant 32 : index
    %46 = vector.load %arg8[%c0_23, %c32] : memref<16x128xf32, #tpu.memory_space<vmem>>, vector<16x32xf32>
    tpu.vector_store %arg8[%c0_23, %c32], %35 {strides = array<i32>} : memref<16x128xf32, #tpu.memory_space<vmem>>, vector<16x32xf32>,
    %c0_24 = arith.constant 0 : index
    %c64 = arith.constant 64 : index
    %47 = vector.load %arg8[%c0_24, %c64] : memref<16x128xf32, #tpu.memory_space<vmem>>, vector<16x64xf32>
    tpu.vector_store %arg8[%c0_24, %c64], %44 {strides = array<i32>} : memref<16x128xf32, #tpu.memory_space<vmem>>, vector<16x64xf32>,
    return
  }
  func.func @transform_0(%arg0: i32) -> (i32, i32) {
    %c0_i32 = arith.constant 0 : i32
    %c0_i32_0 = arith.constant 0 : i32
    return %arg0, %c0_i32 : i32, i32
  }
  func.func @transform_1(%arg0: i32) -> (i32, i32) {
    %c0_i32 = arith.constant 0 : i32
    %c0_i32_0 = arith.constant 0 : i32
    %c0_i32_1 = arith.constant 0 : i32
    return %c0_i32, %c0_i32_0 : i32, i32
  }
  func.func @transform_2(%arg0: i32) -> (i32, i32) {
    %c0_i32 = arith.constant 0 : i32
    %c0_i32_0 = arith.constant 0 : i32
    return %arg0, %c0_i32 : i32, i32
  }
  func.func @transform_3(%arg0: i32) -> (i32, i32) {
    %c0_i32 = arith.constant 0 : i32
    %c0_i32_0 = arith.constant 0 : i32
    %c0_i32_1 = arith.constant 0 : i32
    return %c0_i32, %c0_i32_0 : i32, i32
  }
  func.func @transform_4(%arg0: i32) -> (i32, i32) {
    %c0_i32 = arith.constant 0 : i32
    %c0_i32_0 = arith.constant 0 : i32
    %c0_i32_1 = arith.constant 0 : i32
    return %c0_i32, %c0_i32_0 : i32, i32
  }
  func.func @transform_5(%arg0: i32) -> (i32, i32) {
    %c0_i32 = arith.constant 0 : i32
    %c0_i32_0 = arith.constant 0 : i32
    %c0_i32_1 = arith.constant 0 : i32
    return %c0_i32, %c0_i32_0 : i32, i32
  }
  func.func @transform_6(%arg0: i32) -> (i32, i32) {
    %c0_i32 = arith.constant 0 : i32
    %c0_i32_0 = arith.constant 0 : i32
    %c0_i32_1 = arith.constant 0 : i32
    return %c0_i32, %c0_i32_0 : i32, i32
  }
  func.func @transform_7(%arg0: i32) -> (i32, i32) {
    %c0_i32 = arith.constant 0 : i32
    %c0_i32_0 = arith.constant 0 : i32
    return %arg0, %c0_i32 : i32, i32
  }
}

</mosaic_0001>

<llo_original>
// kernel: recurrent_gcn_lrgcn_forward.1
$region0: #{recurrent_gcn_lrgcn_forward.1}
  #allocation0 [shape = 'u32[]', space=smem, size = 0x4, offset = 0x4, fixed_abs, tag = 'smem constant byte address 0x4 - core index']
  #allocation1 [shape = 'u32[144,128]{1,0:T(1,128)}', space=vmem, size = 0x12000, scoped, tag = 'internal scratch']
  %s0 = inlined_call_operand.vmem [shape: f32[16,16], index: 0, kind: input, shape index: {}]
  %s1 = inlined_call_operand.vmem [shape: f32[16,37], index: 1, kind: input, shape index: {}]
  %s2 = inlined_call_operand.vmem [shape: f32[16,32], index: 2, kind: input, shape index: {}]
  %s3 = inlined_call_operand.vmem [shape: f32[37,128], index: 3, kind: input, shape index: {}]
  %s4 = inlined_call_operand.vmem [shape: f32[37,128], index: 4, kind: input, shape index: {}]
  %s5 = inlined_call_operand.vmem [shape: f32[32,64], index: 5, kind: input, shape index: {}]
  %s6 = inlined_call_operand.vmem [shape: f32[1,64], index: 6, kind: input, shape index: {}]
  %s7 = inlined_call_operand.vmem [shape: f32[16,128], index: 7, kind: output, shape index: {}]
  %s8 = sld [smem:[#allocation0]]
  $region38: #{recurrent_gcn_lrgcn_forward.1} parent=0
    _
  %s10 = ssub.s32 1, %s8
  %s11 = scalar_select 0, %s10, %s8
  // Predicated region
  $region2: #{recurrent_gcn_lrgcn_forward.1} parent=0 // pred_check
    _
  $region3: #{recurrent_gcn_lrgcn_forward.1} parent=0 // pred_check_branch
    %13 = sbr.rel (0) target = $region5
  $region4: #{recurrent_gcn_lrgcn_forward.1} parent=0 // pred_region
    _
  $region5: #{recurrent_gcn_lrgcn_forward.1} parent=0 // pred_fallthru
    _
  // Predicated region
  $region6: #{recurrent_gcn_lrgcn_forward.1} parent=0 // pred_check
    _
  $region7: #{recurrent_gcn_lrgcn_forward.1} parent=0 // pred_check_branch
    %15 = sbr.rel (0) target = $region9
  $region8: #{recurrent_gcn_lrgcn_forward.1} parent=0 // pred_region
    _
  $region9: #{recurrent_gcn_lrgcn_forward.1} parent=0 // pred_fallthru
    _
  // Predicated region
  $region10: #{recurrent_gcn_lrgcn_forward.1} parent=0 // pred_check
    _
  $region11: #{recurrent_gcn_lrgcn_forward.1} parent=0 // pred_check_branch
    %17 = sbr.rel (0) target = $region13
  $region12: #{recurrent_gcn_lrgcn_forward.1} parent=0 // pred_region
    _
  $region13: #{recurrent_gcn_lrgcn_forward.1} parent=0 // pred_fallthru
    _
  // Predicated region
  $region14: #{recurrent_gcn_lrgcn_forward.1} parent=0 // pred_check
    _
  $region15: #{recurrent_gcn_lrgcn_forward.1} parent=0 // pred_check_branch
    %19 = sbr.rel (0) target = $region17
  $region16: #{recurrent_gcn_lrgcn_forward.1} parent=0 // pred_region
    _
  $region17: #{recurrent_gcn_lrgcn_forward.1} parent=0 // pred_fallthru
    _
  // Predicated region
  $region18: #{recurrent_gcn_lrgcn_forward.1} parent=0 // pred_check
    _
  $region19: #{recurrent_gcn_lrgcn_forward.1} parent=0 // pred_check_branch
    %21 = sbr.rel (0) target = $region21
  $region20: #{recurrent_gcn_lrgcn_forward.1} parent=0 // pred_region
    _
  $region21: #{recurrent_gcn_lrgcn_forward.1} parent=0 // pred_fallthru
    _
  // Predicated region
  $region22: #{recurrent_gcn_lrgcn_forward.1} parent=0 // pred_check
    _
  $region23: #{recurrent_gcn_lrgcn_forward.1} parent=0 // pred_check_branch
    %23 = sbr.rel (0) target = $region25
  $region24: #{recurrent_gcn_lrgcn_forward.1} parent=0 // pred_region
    _
  $region25: #{recurrent_gcn_lrgcn_forward.1} parent=0 // pred_fallthru
    _
  // Predicated region
  $region26: #{recurrent_gcn_lrgcn_forward.1} parent=0 // pred_check
    _
  $region27: #{recurrent_gcn_lrgcn_forward.1} parent=0 // pred_check_branch
    %25 = sbr.rel (0) target = $region29
  $region28: #{recurrent_gcn_lrgcn_forward.1} parent=0 // pred_region
    _
  $region29: #{recurrent_gcn_lrgcn_forward.1} parent=0 // pred_fallthru
    _
  %s26 = smul.u32 0, 16
  %v27 = vld [vmem:[%s0] sm:$0xff]
  %v28 = vld [vmem:[%s0 + $0x8] sm:$0xff]
  %v29 = vld [vmem:[%s1] sm:$0xff]
  %v30 = vld [vmem:[%s1 + $0x8] sm:$0xff]
  %s31 = scalar_lea.vmem %s1, %s26
  %v32 = vld [vmem:[%s31] sm:$0xff]
  %v33 = vld [vmem:[%s31 + $0x8] sm:$0xff]
  %v34 = vld [vmem:[%s2] sm:$0xff]
  %v35 = vld [vmem:[%s2 + $0x8] sm:$0xff]
  %vm36 = vcmask 130048
  %v38 = vsel %vm36, %v27, 0
  %v41 = vsel %vm36, %v28, 0
  %43 = vmatprep.subr.mxu0 0.0
  %44 = vmatpush1.msra.mxu0 %v29
  %45 = vmatprep.subr.mxu0 0.0
  %46 = vmatpush1.msra.mxu0 %v30
  %47 = vmatprep.subr.mxu0 0.0
  %48 = vmatpush1.msra.mxu0 0.0
  %49 = vmatprep.subr.mxu0 0.0
  %50 = vmatpush1.msra.mxu0 0.0
  %51 = vmatprep.subr.mxu0 0.0
  %52 = vmatpush1.msra.mxu0 0.0
  %53 = vmatprep.subr.mxu0 0.0
  %54 = vmatpush1.msra.mxu0 0.0
  %55 = vmatprep.subr.mxu0 0.0
  %56 = vmatpush1.msra.mxu0 0.0
  %57 = vmatprep.subr.mxu0 0.0
  %58 = vmatpush1.msra.mxu0 0.0
  %59 = vmatprep.subr.mxu0 0.0
  %60 = vmatpush1.msra.mxu0 0.0
  %61 = vmatprep.subr.mxu0 0.0
  %62 = vmatpush1.msra.mxu0 0.0
  %63 = vmatprep.subr.mxu0 0.0
  %64 = vmatpush1.msra.mxu0 0.0
  %65 = vmatprep.subr.mxu0 0.0
  %66 = vmatpush1.msra.mxu0 0.0
  %67 = vmatprep.subr.mxu0 0.0
  %68 = vmatpush1.msra.mxu0 0.0
  %69 = vmatprep.subr.mxu0 0.0
  %70 = vmatpush1.msra.mxu0 0.0
  %71 = vmatprep.subr.mxu0 0.0
  %72 = vmatpush1.msra.mxu0 0.0
  %73 = vmatprep.subr.mxu0 0.0
  %74 = vmatpush1.msra.mxu0 0.0
  %75 = vmatprep.subr.mxu0 0.0
  %76 = vmatpush1.msra.mxu0 0.0
  %77 = vmatprep.subr.mxu0 0.0
  %78 = vmatpush1.msra.mxu0 0.0
  %79 = vmatprep.subr.mxu0 0.0
  %80 = vmatpush1.msra.mxu0 0.0
  %81 = vmatprep.subr.mxu0 0.0
  %82 = vmatpush1.msra.mxu0 0.0
  %83 = vmatprep.subr.mxu0 0.0
  %84 = vmatpush1.msra.mxu0 0.0
  %85 = vmatprep.subr.mxu0 0.0
  %86 = vmatpush1.msra.mxu0 0.0
  %87 = vmatprep.subr.mxu0 0.0
  %88 = vmatpush1.msra.mxu0 0.0
  %89 = vmatprep.subr.mxu0 0.0
  %90 = vmatpush1.msra.mxu0 0.0
  %91 = vmatprep.subr.mxu0 0.0
  %92 = vmatpush1.msra.mxu0 0.0
  %93 = vmatprep.subr.mxu0 0.0
  %94 = vmatpush1.msra.mxu0 0.0
  %95 = vmatprep.subr.mxu0 0.0
  %96 = vmatpush1.msra.mxu0 0.0
  %97 = vmatprep.subr.mxu0 0.0
  %98 = vmatpush1.msra.mxu0 0.0
  %99 = vmatprep.subr.mxu0 0.0
  %100 = vmatpush1.msra.mxu0 0.0
  %101 = vmatprep.subr.mxu0 0.0
  %102 = vmatpush1.msra.mxu0 0.0
  %103 = vmatprep.subr.mxu0 0.0
  %104 = vmatpush1.msra.mxu0 0.0
  %105 = vmatprep.subr.mxu0 0.0
  %106 = vmatpush1.msra.mxu0 0.0
  %107 = vmatprep.mubr.f32.mxu0 0.0
  %108 = vmatmul.mubr.f32.gmra.mrb[0].mxu0 %v38
  %v109 = vpop.f32.mrb[0].mxu0
  %v110 = vadd.f32 0.0, %v109
  %v111 = vpop.f32.mrb[0].mxu0
  %112 = vmatprep.mubr.f32.mxu0 0.0
  %113 = vmatmul.mubr.f32.gmra.mrb[0].mxu0 %v41
  %v114 = vpop.f32.mrb[0].mxu0
  %v115 = vadd.f32 0.0, %v114
  %v116 = vpop.f32.mrb[0].mxu0
  %117 = vdwg.mxu0
  %v118 = vld [vmem:[%s3] sm:$0xff]
  %v119 = vld [vmem:[%s3 + $0x8] sm:$0xff]
  %v120 = vld [vmem:[%s3 + $0x10] sm:$0xff]
  %v121 = vld [vmem:[%s3 + $0x18] sm:$0xff]
  %v122 = vld [vmem:[%s3 + $0x20] sm:$0x1f]
  %v123 = vld [vmem:[%s4] sm:$0xff]
  %v124 = vld [vmem:[%s4 + $0x8] sm:$0xff]
  %v125 = vld [vmem:[%s4 + $0x10] sm:$0xff]
  %v126 = vld [vmem:[%s4 + $0x18] sm:$0xff]
  %v127 = vld [vmem:[%s4 + $0x20] sm:$0x1f]
  %vm128 = vcmask 302080
  %v130 = vsel %vm128, %v32, 0
  %v133 = vsel %vm128, %v33, 0
  %vm135 = vcmask 1044480
  %v137 = vsel %vm135, %v127, 0
  %139 = vmatprep.subr.mxu0 0.0
  %140 = vmatpush1.msra.mxu0 %v123
  %141 = vmatprep.subr.mxu0 0.0
  %142 = vmatpush1.msra.mxu0 %v124
  %143 = vmatprep.subr.mxu0 0.0
  %144 = vmatpush1.msra.mxu0 %v125
  %145 = vmatprep.subr.mxu0 0.0
  %146 = vmatpush1.msra.mxu0 %v126
  %147 = vmatprep.subr.mxu0 0.0
  %148 = vmatpush1.msra.mxu0 %v137
  %149 = vmatprep.subr.mxu0 0.0
  %150 = vmatpush1.msra.mxu0 0.0
  %151 = vmatprep.subr.mxu0 0.0
  %152 = vmatpush1.msra.mxu0 0.0
  %153 = vmatprep.subr.mxu0 0.0
  %154 = vmatpush1.msra.mxu0 0.0
  %155 = vmatprep.subr.mxu0 0.0
  %156 = vmatpush1.msra.mxu0 0.0
  %157 = vmatprep.subr.mxu0 0.0
  %158 = vmatpush1.msra.mxu0 0.0
  %159 = vmatprep.subr.mxu0 0.0
  %160 = vmatpush1.msra.mxu0 0.0
  %161 = vmatprep.subr.mxu0 0.0
  %162 = vmatpush1.msra.mxu0 0.0
  %163 = vmatprep.subr.mxu0 0.0
  %164 = vmatpush1.msra.mxu0 0.0
  %165 = vmatprep.subr.mxu0 0.0
  %166 = vmatpush1.msra.mxu0 0.0
  %167 = vmatprep.subr.mxu0 0.0
  %168 = vmatpush1.msra.mxu0 0.0
  %169 = vmatprep.subr.mxu0 0.0
  %170 = vmatpush1.msra.mxu0 0.0
  %171 = vmatprep.subr.mxu0 0.0
  %172 = vmatpush1.msra.mxu0 0.0
  %173 = vmatprep.subr.mxu0 0.0
  %174 = vmatpush1.msra.mxu0 0.0
  %175 = vmatprep.subr.mxu0 0.0
  %176 = vmatpush1.msra.mxu0 0.0
  %177 = vmatprep.subr.mxu0 0.0
  %178 = vmatpush1.msra.mxu0 0.0
  %179 = vmatprep.subr.mxu0 0.0
  %180 = vmatpush1.msra.mxu0 0.0
  %181 = vmatprep.subr.mxu0 0.0
  %182 = vmatpush1.msra.mxu0 0.0
  %183 = vmatprep.subr.mxu0 0.0
  %184 = vmatpush1.msra.mxu0 0.0
  %185 = vmatprep.subr.mxu0 0.0
  %186 = vmatpush1.msra.mxu0 0.0
  %187 = vmatprep.subr.mxu0 0.0
  %188 = vmatpush1.msra.mxu0 0.0
  %189 = vmatprep.subr.mxu0 0.0
  %190 = vmatpush1.msra.mxu0 0.0
  %191 = vmatprep.subr.mxu0 0.0
  %192 = vmatpush1.msra.mxu0 0.0
  %193 = vmatprep.subr.mxu0 0.0
  %194 = vmatpush1.msra.mxu0 0.0
  %195 = vmatprep.subr.mxu0 0.0
  %196 = vmatpush1.msra.mxu0 0.0
  %197 = vmatprep.subr.mxu0 0.0
  %198 = vmatpush1.msra.mxu0 0.0
  %199 = vmatprep.subr.mxu0 0.0
  %200 = vmatpush1.msra.mxu0 0.0
  %201 = vmatprep.subr.mxu0 0.0
  %202 = vmatpush1.msra.mxu0 0.0
  %203 = vmatprep.mubr.f32.mxu0 0.0
  %204 = vmatmul.mubr.f32.gmra.mrb[0].mxu0 %v130
  %v205 = vpop.f32.mrb[0].mxu0
  %v206 = vadd.f32 0.0, %v205
  %v207 = vpop.f32.mrb[0].mxu0
  %208 = vmatprep.mubr.f32.mxu0 0.0
  %209 = vmatmul.mubr.f32.gmra.mrb[0].mxu0 %v133
  %v210 = vpop.f32.mrb[0].mxu0
  %v211 = vadd.f32 0.0, %v210
  %v212 = vpop.f32.mrb[0].mxu0
  %213 = vdwg.mxu0
  %v215 = vsel %vm128, %v110, 0
  %v218 = vsel %vm128, %v115, 0
  %v221 = vsel %vm135, %v122, 0
  %223 = vmatprep.subr.mxu0 0.0
  %224 = vmatpush1.msra.mxu0 %v118
  %225 = vmatprep.subr.mxu0 0.0
  %226 = vmatpush1.msra.mxu0 %v119
  %227 = vmatprep.subr.mxu0 0.0
  %228 = vmatpush1.msra.mxu0 %v120
  %229 = vmatprep.subr.mxu0 0.0
  %230 = vmatpush1.msra.mxu0 %v121
  %231 = vmatprep.subr.mxu0 0.0
  %232 = vmatpush1.msra.mxu0 %v221
  %233 = vmatprep.subr.mxu0 0.0
  %234 = vmatpush1.msra.mxu0 0.0
  %235 = vmatprep.subr.mxu0 0.0
  %236 = vmatpush1.msra.mxu0 0.0
  %237 = vmatprep.subr.mxu0 0.0
  %238 = vmatpush1.msra.mxu0 0.0
  %239 = vmatprep.subr.mxu0 0.0
  %240 = vmatpush1.msra.mxu0 0.0
  %241 = vmatprep.subr.mxu0 0.0
  %242 = vmatpush1.msra.mxu0 0.0
  %243 = vmatprep.subr.mxu0 0.0
  %244 = vmatpush1.msra.mxu0 0.0
  %245 = vmatprep.subr.mxu0 0.0
  %246 = vmatpush1.msra.mxu0 0.0
  %247 = vmatprep.subr.mxu0 0.0
  %248 = vmatpush1.msra.mxu0 0.0
  %249 = vmatprep.subr.mxu0 0.0
  %250 = vmatpush1.msra.mxu0 0.0
  %251 = vmatprep.subr.mxu0 0.0
  %252 = vmatpush1.msra.mxu0 0.0
  %253 = vmatprep.subr.mxu0 0.0
  %254 = vmatpush1.msra.mxu0 0.0
  %255 = vmatprep.subr.mxu0 0.0
  %256 = vmatpush1.msra.mxu0 0.0
  %257 = vmatprep.subr.mxu0 0.0
  %258 = vmatpush1.msra.mxu0 0.0
  %259 = vmatprep.subr.mxu0 0.0
  %260 = vmatpush1.msra.mxu0 0.0
  %261 = vmatprep.subr.mxu0 0.0
  %262 = vmatpush1.msra.mxu0 0.0
  %263 = vmatprep.subr.mxu0 0.0
  %264 = vmatpush1.msra.mxu0 0.0
  %265 = vmatprep.subr.mxu0 0.0
  %266 = vmatpush1.msra.mxu0 0.0
  %267 = vmatprep.subr.mxu0 0.0
  %268 = vmatpush1.msra.mxu0 0.0
  %269 = vmatprep.subr.mxu0 0.0
  %270 = vmatpush1.msra.mxu0 0.0
  %271 = vmatprep.subr.mxu0 0.0
  %272 = vmatpush1.msra.mxu0 0.0
  %273 = vmatprep.subr.mxu0 0.0
  %274 = vmatpush1.msra.mxu0 0.0
  %275 = vmatprep.subr.mxu0 0.0
  %276 = vmatpush1.msra.mxu0 0.0
  %277 = vmatprep.subr.mxu0 0.0
  %278 = vmatpush1.msra.mxu0 0.0
  %279 = vmatprep.subr.mxu0 0.0
  %280 = vmatpush1.msra.mxu0 0.0
  %281 = vmatprep.subr.mxu0 0.0
  %282 = vmatpush1.msra.mxu0 0.0
  %283 = vmatprep.subr.mxu0 0.0
  %284 = vmatpush1.msra.mxu0 0.0
  %285 = vmatprep.subr.mxu0 0.0
  %286 = vmatpush1.msra.mxu0 0.0
  %287 = vmatprep.mubr.f32.mxu0 0.0
  %288 = vmatmul.mubr.f32.gmra.mrb[0].mxu0 %v215
  %v289 = vpop.f32.mrb[0].mxu0
  %v290 = vadd.f32 %v206, %v289
  %v291 = vpop.f32.mrb[0].mxu0
  %292 = vmatprep.mubr.f32.mxu0 0.0
  %293 = vmatmul.mubr.f32.gmra.mrb[0].mxu0 %v218
  %v294 = vpop.f32.mrb[0].mxu0
  %v295 = vadd.f32 %v211, %v294
  %v296 = vpop.f32.mrb[0].mxu0
  %297 = vdwg.mxu0
  %v298 = vxor.u32 %v290, 2147483648
  %v299 = vxor.u32 %v295, 2147483648
  %v300 = vmul.f32 %v298, 1.442695
  %v301 = vpow.pop %v300
  %v302 = vmul.f32 %v299, 1.442695
  %v303 = vpow.pop %v302
  %v304 = vadd.f32 %v301, 1.0
  %v305 = vadd.f32 %v303, 1.0
  %v306 = vrcp.pop %v304
  %v307 = vmul.f32 1.0, %v306
  %v308 = vrcp.pop %v305
  %v309 = vmul.f32 1.0, %v308
  %v310 = vtanh.pop %v290
  %v311 = vtanh.pop %v295
  %314 = vrot.lane.b32.xlu0 %v34, 32
  %v315 = vpop.permute.xlu0 %314
  %316 = vrot.lane.b32.xlu0 %v35, 32
  %v317 = vpop.permute.xlu0 %316
  %v320 = vmul.f32 %v307, %v315
  %v321 = vmul.f32 %v309, %v317
  %324 = vrot.lane.b32.xlu0 %v310, 64
  %v325 = vpop.permute.xlu0 %324
  %326 = vrot.lane.b32.xlu0 %v311, 64
  %v327 = vpop.permute.xlu0 %326
  %v330 = vmul.f32 %v307, %v325
  %v331 = vmul.f32 %v309, %v327
  %334 = vrot.lane.b32.xlu0 %v330, 32
  %v335 = vpop.permute.xlu0 %334
  %336 = vrot.lane.b32.xlu0 %v331, 32
  %v337 = vpop.permute.xlu0 %336
  %v340 = vadd.f32 %v320, %v335
  %v341 = vadd.f32 %v321, %v337
  %v342 = vtanh.pop %v340
  %v343 = vtanh.pop %v341
  %346 = vrot.lane.b32.xlu0 %v342, 64
  %v347 = vpop.permute.xlu0 %346
  %348 = vrot.lane.b32.xlu0 %v343, 64
  %v349 = vpop.permute.xlu0 %348
  %v352 = vmul.f32 %v307, %v347
  %v353 = vmul.f32 %v309, %v349
  %v354 = vmax.f32 %v352, 0.0
  %v355 = vmax.f32 %v353, 0.0
  %v356 = vld [vmem:[%s5] sm:$0xff]
  %v357 = vld [vmem:[%s5 + $0x8] sm:$0xff]
  %v358 = vld [vmem:[%s5 + $0x10] sm:$0xff]
  %v359 = vld [vmem:[%s5 + $0x18] sm:$0xff]
  %v360 = vld [vmem:[%s6] sm:$0x1]
  %v362 = vlaneseq
  %v363 = vshrl.u32 %v362, 7
  %v364 = vsub.s32 0, %v363
  %v365 = vrot.slane %v360, %v364
  %369 = vrot.lane.b32.xlu0 %v354, 32
  %v370 = vpop.permute.xlu0 %369
  %371 = vrot.lane.b32.xlu0 %v355, 32
  %v372 = vpop.permute.xlu0 %371
  %vm373 = vcmask 261120
  %v374 = vsel %vm373, %v370, 0
  %v376 = vsel %vm373, %v372, 0
  %378 = vmatprep.subr.mxu0 0.0
  %379 = vmatpush1.msra.mxu0 %v356
  %380 = vmatprep.subr.mxu0 0.0
  %381 = vmatpush1.msra.mxu0 %v357
  %382 = vmatprep.subr.mxu0 0.0
  %383 = vmatpush1.msra.mxu0 %v358
  %384 = vmatprep.subr.mxu0 0.0
  %385 = vmatpush1.msra.mxu0 %v359
  %386 = vmatprep.subr.mxu0 0.0
  %387 = vmatpush1.msra.mxu0 0.0
  %388 = vmatprep.subr.mxu0 0.0
  %389 = vmatpush1.msra.mxu0 0.0
  %390 = vmatprep.subr.mxu0 0.0
  %391 = vmatpush1.msra.mxu0 0.0
  %392 = vmatprep.subr.mxu0 0.0
  %393 = vmatpush1.msra.mxu0 0.0
  %394 = vmatprep.subr.mxu0 0.0
  %395 = vmatpush1.msra.mxu0 0.0
  %396 = vmatprep.subr.mxu0 0.0
  %397 = vmatpush1.msra.mxu0 0.0
  %398 = vmatprep.subr.mxu0 0.0
  %399 = vmatpush1.msra.mxu0 0.0
  %400 = vmatprep.subr.mxu0 0.0
  %401 = vmatpush1.msra.mxu0 0.0
  %402 = vmatprep.subr.mxu0 0.0
  %403 = vmatpush1.msra.mxu0 0.0
  %404 = vmatprep.subr.mxu0 0.0
  %405 = vmatpush1.msra.mxu0 0.0
  %406 = vmatprep.subr.mxu0 0.0
  %407 = vmatpush1.msra.mxu0 0.0
  %408 = vmatprep.subr.mxu0 0.0
  %409 = vmatpush1.msra.mxu0 0.0
  %410 = vmatprep.subr.mxu0 0.0
  %411 = vmatpush1.msra.mxu0 0.0
  %412 = vmatprep.subr.mxu0 0.0
  %413 = vmatpush1.msra.mxu0 0.0
  %414 = vmatprep.subr.mxu0 0.0
  %415 = vmatpush1.msra.mxu0 0.0
  %416 = vmatprep.subr.mxu0 0.0
  %417 = vmatpush1.msra.mxu0 0.0
  %418 = vmatprep.subr.mxu0 0.0
  %419 = vmatpush1.msra.mxu0 0.0
  %420 = vmatprep.subr.mxu0 0.0
  %421 = vmatpush1.msra.mxu0 0.0
  %422 = vmatprep.subr.mxu0 0.0
  %423 = vmatpush1.msra.mxu0 0.0
  %424 = vmatprep.subr.mxu0 0.0
  %425 = vmatpush1.msra.mxu0 0.0
  %426 = vmatprep.subr.mxu0 0.0
  %427 = vmatpush1.msra.mxu0 0.0
  %428 = vmatprep.subr.mxu0 0.0
  %429 = vmatpush1.msra.mxu0 0.0
  %430 = vmatprep.subr.mxu0 0.0
  %431 = vmatpush1.msra.mxu0 0.0
  %432 = vmatprep.subr.mxu0 0.0
  %433 = vmatpush1.msra.mxu0 0.0
  %434 = vmatprep.subr.mxu0 0.0
  %435 = vmatpush1.msra.mxu0 0.0
  %436 = vmatprep.subr.mxu0 0.0
  %437 = vmatpush1.msra.mxu0 0.0
  %438 = vmatprep.subr.mxu0 0.0
  %439 = vmatpush1.msra.mxu0 0.0
  %440 = vmatprep.subr.mxu0 0.0
  %441 = vmatpush1.msra.mxu0 0.0
  %442 = vmatprep.mubr.f32.mxu0 0.0
  %443 = vmatmul.mubr.f32.gmra.mrb[0].mxu0 %v374
  %v444 = vpop.f32.mrb[0].mxu0
  %v445 = vadd.f32 %v365, %v444
  %v446 = vpop.f32.mrb[0].mxu0
  %447 = vmatprep.mubr.f32.mxu0 0.0
  %448 = vmatmul.mubr.f32.gmra.mrb[0].mxu0 %v376
  %v449 = vpop.f32.mrb[0].mxu0
  %v450 = vadd.f32 %v365, %v449
  %v451 = vpop.f32.mrb[0].mxu0
  %452 = vdwg.mxu0
  %455 = vrot.lane.b32.xlu0 %v352, 32
  %v456 = vpop.permute.xlu0 %455
  %457 = vrot.lane.b32.xlu0 %v353, 32
  %v458 = vpop.permute.xlu0 %457
  %461 = vst.msk [vmem:[%s7] sm:$0xff] %vm373, %v456
  %462 = vst.msk [vmem:[%s7 + $0x8] sm:$0xff] %vm373, %v458
  %vm463 = vcmask 523520
  %464 = vst.msk [vmem:[%s7] sm:$0xff] %vm463, %v340
  %465 = vst.msk [vmem:[%s7 + $0x8] sm:$0xff] %vm463, %v341
  %468 = vrot.lane.b32.xlu0 %v445, 64
  %v469 = vpop.permute.xlu0 %468
  %470 = vrot.lane.b32.xlu0 %v450, 64
  %v471 = vpop.permute.xlu0 %470
  %vm474 = vcmask 1048064
  %475 = vst.msk [vmem:[%s7] sm:$0xff] %vm474, %v469
  %476 = vst.msk [vmem:[%s7 + $0x8] sm:$0xff] %vm474, %v471
  // Predicated region
  $region30: #{recurrent_gcn_lrgcn_forward.1} parent=0 // pred_check
    _
  $region31: #{recurrent_gcn_lrgcn_forward.1} parent=0 // pred_check_branch
    %478 = sbr.rel (0) target = $region33
  $region32: #{recurrent_gcn_lrgcn_forward.1} parent=0 // pred_region
    _
  $region33: #{recurrent_gcn_lrgcn_forward.1} parent=0 // pred_fallthru
    _
  // Predicated region
  $region34: #{recurrent_gcn_lrgcn_forward.1} parent=0 // pred_check
    _
  $region35: #{recurrent_gcn_lrgcn_forward.1} parent=0 // pred_check_branch
    %480 = sbr.rel (0) target = $region37
  $region36: #{recurrent_gcn_lrgcn_forward.1} parent=0 // pred_region
    _
  $region37: #{recurrent_gcn_lrgcn_forward.1} parent=0 // pred_fallthru
    _

</llo_original>
